<compile_context>
chip_gen: v5e
topology: v5e:2x2
jax: 0.10.0
libtpu: 0.0.40
codegen_flags: <defaults>
</compile_context>

<pallas_src>
import functools

import jax
import jax.numpy as jnp
import numpy as np
from jax.experimental import pallas as pl
from jax.experimental.pallas import tpu as pltpu

_LANES = 128


def _add_weights_kernel_row(x_ref, w_ref, o_ref, *, skolik):
    """x_ref: (R_TILE, L) VMEM; w_ref: (1, L) VMEM row; o_ref: (R_TILE, L) VMEM."""
    x = x_ref[...]
    w = w_ref[...]                       # (1, L) -> sublane broadcast
    if skolik:
        # ((x + 1)/2) * w == x*(w/2) + (w/2); w was pre-halved in the wrapper.
        o_ref[...] = x * w + w
    else:
        o_ref[...] = x * w


def _add_weights_kernel_scalar(x_ref, w_ref, o_ref, *, skolik):
    """x_ref: (R_TILE, L) VMEM; w_ref: (1,) SMEM scalar; o_ref: (R_TILE, L) VMEM."""
    x = x_ref[...]
    w = w_ref[0]                         # scalar from SMEM
    if skolik:
        o_ref[...] = x * w + w
    else:
        o_ref[...] = x * w


def add_weights_forward(inputs, weights, *, process_input="None"):
    """inputs: (B, D) f32; weights: (1, D) ('unique') or (1,) ('same')."""
    B, D = inputs.shape
    dtype = inputs.dtype
    skolik = (process_input == "skolik")

    w_vec = jnp.reshape(weights, (-1,)).astype(dtype)      # (D,) or (1,)
    scalar_weight = (w_vec.shape[0] == 1)
    if skolik:
        w_vec = w_vec * 0.5              # fold the /2 into the (tiny) weight

    total = B * D
    # ---- layout selection (zero-cost relabels only, no transposes) ----------
    if total % _LANES == 0 and (scalar_weight or _LANES % D == 0):
        # Row-major contiguous relabel: (B, D) -> (B*D/128, 128).
        rows = total // _LANES
        x2 = jnp.reshape(inputs, (rows, _LANES))
        if scalar_weight:
            w_row = None
        else:
            # Per-row feature pattern repeats exactly (D divides 128).
            w_row = jnp.tile(w_vec, _LANES // D).reshape(1, _LANES)
        restore = lambda y: jnp.reshape(y, (B, D))
    else:
        # Fallback: natural (B, D) layout (block last dim == full array dim).
        x2 = inputs
        w_row = None if scalar_weight else w_vec.reshape(1, D)
        restore = lambda y: y

    R, L = x2.shape

    # ---- grid / tile selection ----------------------------------------------
    itemsize = jnp.dtype(dtype).itemsize
    row_bytes = L * itemsize
    MAX_SINGLE_BLOCK_BYTES = 8 << 20           # single block for anything small
    if R * row_bytes <= MAX_SINGLE_BLOCK_BYTES:
        r_tile = R
    else:
        target_rows = max(8, (2 << 20) // row_bytes)   # ~2 MiB per tile
        r_tile = R                                      # fallback: one big block
        for cand in (16384, 8192, 4096, 2048, 1024, 512, 256, 128, 64, 32, 16, 8):
            if cand <= target_rows and R % cand == 0:
                r_tile = cand
                break
    grid = (R // r_tile,)

    block_bytes = r_tile * L * itemsize
    # in + out, double-buffered, plus slack; capped for v7x's 64 MiB VMEM.
    vmem_budget = int(min(48 << 20, max(4 << 20, 4 * block_bytes + (1 << 20))))
    dims = ("parallel",) if grid[0] > 1 else ("arbitrary",)
    cparams = pltpu.CompilerParams(dimension_semantics=dims,
                                   vmem_limit_bytes=vmem_budget)

    # ---- kernel + specs ------------------------------------------------------
    if scalar_weight:
        kernel = functools.partial(_add_weights_kernel_scalar, skolik=skolik)
        w_arg = w_vec.reshape(1)                        # (1,) scalar in SMEM
        w_spec = pl.BlockSpec(memory_space=pltpu.MemorySpace.SMEM)
    else:
        kernel = functools.partial(_add_weights_kernel_row, skolik=skolik)
        w_arg = w_row                                   # (1, L) row in VMEM
        w_spec = pl.BlockSpec((1, L), lambda i: (0, 0))

    out2 = pl.pallas_call(
        kernel,
        out_shape=jax.ShapeDtypeStruct((R, L), dtype),
        grid=grid,
        in_specs=[pl.BlockSpec((r_tile, L), lambda i: (i, 0)), w_spec],
        out_specs=pl.BlockSpec((r_tile, L), lambda i: (i, 0)),
        compiler_params=cparams,
    )(x2, w_arg)

    return restore(out2)


def reference_forward(inputs, weights, *, process_input="None"):
    """Pure-JAX mirror of the literal PyTorch forward."""
    if process_input == "skolik":
        inputs = (inputs + 1.0) / 2.0
    return inputs * weights


if __name__ == "__main__":
    key = jax.random.PRNGKey(0)
    k_x, k_w, k_x2 = jax.random.split(key, 3)

    # Shapes consistent with the module's use inside the quantum layer:
    # input_size = input_dim(4) * data_reuploading_layers(4) = 16; batch = 256.
    B, D = 256, 16
    inputs = jax.random.uniform(k_x, (B, D), dtype=jnp.float32,
                                minval=-1.0, maxval=1.0)

    # weights_type='unique', sampling_type='random' -> (1, D), uniform(0, pi)
    w_unique = jax.random.uniform(k_w, (1, D), dtype=jnp.float32,
                                  minval=0.0, maxval=np.pi)
    # weights_type='same', sampling_type='ones' -> (1,), ones (output scaling)
    w_same = jnp.ones((1,), dtype=jnp.float32)

    def check(out, ref):
        np.testing.assert_allclose(np.asarray(out), np.asarray(ref),
                                   rtol=1e-6, atol=1e-6)

    # 1) 'unique' weights, process_input='None' (input-weight layer usage)
    out1 = jax.block_until_ready(
        add_weights_forward(inputs, w_unique, process_input="None"))
    check(out1, reference_forward(inputs, w_unique, process_input="None"))

    # 2) 'unique' weights, process_input='skolik'
    out2 = jax.block_until_ready(
        add_weights_forward(inputs, w_unique, process_input="skolik"))
    check(out2, reference_forward(inputs, w_unique, process_input="skolik"))

    # 3) 'same' scalar weights, process_input='None' (output-scaling usage)
    out3 = jax.block_until_ready(
        add_weights_forward(inputs, w_same, process_input="None"))
    check(out3, reference_forward(inputs, w_same, process_input="None"))

    # 4) 'same' scalar weights, process_input='skolik'
    out4 = jax.block_until_ready(
        add_weights_forward(inputs, w_same, process_input="skolik"))
    check(out4, reference_forward(inputs, w_same, process_input="skolik"))

    # 5) fallback layout path (D does not divide 128): natural (B, D) blocks
    B2, D2 = 8, 10
    inputs2 = jax.random.uniform(k_x2, (B2, D2), dtype=jnp.float32,
                                 minval=-1.0, maxval=1.0)
    w2 = jax.random.uniform(k_w, (1, D2), dtype=jnp.float32,
                            minval=0.0, maxval=np.pi)
    out5 = jax.block_until_ready(
        add_weights_forward(inputs2, w2, process_input="skolik"))
    check(out5, reference_forward(inputs2, w2, process_input="skolik"))

    assert out1.shape == (B, D) and out1.dtype == jnp.float32
    print("KERNEL_OK")
</pallas_src>

<mosaic_0001>
module attributes {stable_mosaic.version = 11 : i64} {
  func.func @_add_weights_kernel_row(%arg0: i32, %arg1: memref<32x128xf32, #tpu.memory_space<vmem>>, %arg2: memref<1x128xf32, #tpu.memory_space<vmem>>, %arg3: memref<32x128xf32, #tpu.memory_space<vmem>>) attributes {dimension_semantics = [#tpu.dimension_semantics<arbitrary>], iteration_bounds = array<i64: 1>, scalar_prefetch = 0 : i64, scratch_operands = 0 : i64, tpu.core_type = #tpu.core_type<tc>, window_params = [{transform_indices = @transform_0, window_bounds = array<i64: 32, 128>}, {pipeline_mode = #tpu.pipeline_mode<synchronous>, transform_indices = @transform_1, window_bounds = array<i64: 1, 128>}, {transform_indices = @transform_2, window_bounds = array<i64: 32, 128>}]} {
    %c0 = arith.constant 0 : index
    %c0_0 = arith.constant 0 : index
    %0 = vector.load %arg1[%c0, %c0_0] : memref<32x128xf32, #tpu.memory_space<vmem>>, vector<32x128xf32>
    %c0_1 = arith.constant 0 : index
    %c0_2 = arith.constant 0 : index
    %1 = vector.load %arg2[%c0_1, %c0_2] : memref<1x128xf32, #tpu.memory_space<vmem>>, vector<1x128xf32>
    %2 = vector.broadcast %1 : vector<1x128xf32> to vector<32x128xf32>
    %3 = arith.mulf %0, %2 : vector<32x128xf32>
    %c0_3 = arith.constant 0 : index
    %c0_4 = arith.constant 0 : index
    %4 = vector.load %arg3[%c0_3, %c0_4] : memref<32x128xf32, #tpu.memory_space<vmem>>, vector<32x128xf32>
    tpu.vector_store %arg3[%c0_3, %c0_4], %3 {strides = array<i32>} : memref<32x128xf32, #tpu.memory_space<vmem>>, vector<32x128xf32>,
    return
  }
  func.func @transform_0(%arg0: i32) -> (i32, i32) {
    %c0_i32 = arith.constant 0 : i32
    %c0_i32_0 = arith.constant 0 : i32
    return %arg0, %c0_i32 : i32, i32
  }
  func.func @transform_1(%arg0: i32) -> (i32, i32) {
    %c0_i32 = arith.constant 0 : i32
    %c0_i32_0 = arith.constant 0 : i32
    %c0_i32_1 = arith.constant 0 : i32
    return %c0_i32, %c0_i32_0 : i32, i32
  }
  func.func @transform_2(%arg0: i32) -> (i32, i32) {
    %c0_i32 = arith.constant 0 : i32
    %c0_i32_0 = arith.constant 0 : i32
    return %arg0, %c0_i32 : i32, i32
  }
}

</mosaic_0001>

<llo_original>
// kernel: tpu_custom_call.1
$region0: #{tpu_custom_call.1}
  #allocation0 [shape = 'u32[]', space=smem, size = 0x4, offset = 0x4, fixed_abs, tag = 'smem constant byte address 0x4 - core index']
  #allocation1 [shape = 'u32[72,128]{1,0:T(1,128)}', space=vmem, size = 0x9000, scoped, tag = 'internal scratch']
  %s0 = inlined_call_operand.hbm [shape: f32[32,128], index: 0, kind: input, shape index: {}]
  %s1 = inlined_call_operand.hbm [shape: f32[1,128], index: 1, kind: input, shape index: {}]
  %s2 = inlined_call_operand.hbm [shape: f32[32,128], index: 2, kind: output, shape index: {}]
  %s3 = sld [smem:[#allocation0]]
  $region26: #{tpu_custom_call.1} parent=0
    _
  %s5 = ssub.s32 1, %s3
  %s6 = scalar_select 0, %s5, %s3
  $region1: #{tpu_custom_call.1} parent=0
    #allocation2 [shape = 'u8[16384]{0}', space=vmem, size = 0x4000, scoped, tag = 'input window, operand 0, single buffered']
    #allocation3 [shape = 's32[1]{0}', space=sflag, size = 0x4, scoped, tag = 'scoped memory for tpu_custom_call.1']
    #allocation4 [shape = 's32[1]{0}', space=sflag, size = 0x4, scoped, tag = 'scoped memory for tpu_custom_call.1']
    #allocation5 [shape = 'u8[512]{0}', space=vmem, size = 0x400, scoped, tag = 'input window, operand 1, single buffered']
    #allocation6 [shape = 's32[1]{0}', space=sflag, size = 0x4, scoped, tag = 'scoped memory for tpu_custom_call.1']
    #allocation7 [shape = 'u8[16384]{0}', space=vmem, size = 0x4000, scoped, tag = 'output window, operand 0, single buffered']
    %7 = vsyncpa [#allocation3], 0
    %8 = vsyncpa [#allocation6], 0
    %9 = vsyncpa [#allocation4], 0
    // Predicated region
    $region2: #{tpu_custom_call.1} parent=1 // pred_check
      _
    $region3: #{tpu_custom_call.1} parent=1 // pred_check_branch
      %11 = sbr.rel (0) target = $region5
    $region4: #{tpu_custom_call.1} parent=1 // pred_region
      %13 = vsyncadd [#allocation3], 0
      %s14 = sshll.u32 %s0, 4
      %s15 = int_to_ptr.hbm [resolvable:$true] %s14
      %s16 = sshll.u32 [#allocation2], 4
      %s17 = int_to_ptr.vmem [resolvable:$true] %s16
      %22 = dma.hbm_to_vmem [thread:$0]  %s15, 512, %s17, [#allocation3], 128, 128, 8
    $region5: #{tpu_custom_call.1} parent=1 // pred_fallthru
      _
    // Predicated region
    $region6: #{tpu_custom_call.1} parent=1 // pred_check
      _
    $region7: #{tpu_custom_call.1} parent=1 // pred_check_branch
      %24 = sbr.rel (0) target = $region9
    $region8: #{tpu_custom_call.1} parent=1 // pred_region
      %26 = vsyncadd [#allocation6], 0
      %s28 = sshll.u32 %s1, 4
      %s29 = int_to_ptr.hbm [resolvable:$true] %s28
      %s30 = sshll.u32 [#allocation5], 4
      %s31 = int_to_ptr.vmem [resolvable:$true] %s30
      %33 = dma.hbm_to_vmem [thread:$0]  %s29, 16, %s31, [#allocation6]
    $region9: #{tpu_custom_call.1} parent=1 // pred_fallthru
      _
    // Predicated region
    $region10: #{tpu_custom_call.1} parent=1 // pred_check
      _
    $region11: #{tpu_custom_call.1} parent=1 // pred_check_branch
      %35 = sbr.rel (0) target = $region13
    $region12: #{tpu_custom_call.1} parent=1 // pred_region
      %37 = dma.done [#allocation3], 512
    $region13: #{tpu_custom_call.1} parent=1 // pred_fallthru
      _
    // Predicated region
    $region14: #{tpu_custom_call.1} parent=1 // pred_check
      _
    $region15: #{tpu_custom_call.1} parent=1 // pred_check_branch
      %39 = sbr.rel (0) target = $region17
    $region16: #{tpu_custom_call.1} parent=1 // pred_region
      %41 = dma.done [#allocation6], 16
    $region17: #{tpu_custom_call.1} parent=1 // pred_fallthru
      _
    %v42 = vld [vmem:[#allocation2] sm:$0xff]
    %v43 = vld [vmem:[#allocation2 + $0x8] sm:$0xff]
    %v44 = vld [vmem:[#allocation2 + $0x10] sm:$0xff]
    %v45 = vld [vmem:[#allocation2 + $0x18] sm:$0xff]
    %v46 = vld [vmem:[#allocation5] sm:$0x1]
    %v48 = vperm.slane %v46, 0
    %v50 = vmul.f32 %v42, %v48
    %v51 = vmul.f32 %v43, %v48
    %v52 = vmul.f32 %v44, %v48
    %v53 = vmul.f32 %v45, %v48
    %54 = vst [vmem:[#allocation7] sm:$0xff] %v50
    %55 = vst [vmem:[#allocation7 + $0x8] sm:$0xff] %v51
    %56 = vst [vmem:[#allocation7 + $0x10] sm:$0xff] %v52
    %57 = vst [vmem:[#allocation7 + $0x18] sm:$0xff] %v53
    // Predicated region
    $region18: #{tpu_custom_call.1} parent=1 // pred_check
      _
    $region19: #{tpu_custom_call.1} parent=1 // pred_check_branch
      %59 = sbr.rel (0) target = $region21
    $region20: #{tpu_custom_call.1} parent=1 // pred_region
      %61 = vsyncadd [#allocation4], 0
      %s62 = sshll.u32 [#allocation7], 4
      %s63 = int_to_ptr.vmem [resolvable:$true] %s62
      %s64 = sshll.u32 %s2, 4
      %s65 = int_to_ptr.hbm [resolvable:$true] %s64
      %70 = dma.vmem_to_hbm [thread:$0]  %s63, 512, %s65, [#allocation4], 128, 128, 8
    $region21: #{tpu_custom_call.1} parent=1 // pred_fallthru
      _
    // Predicated region
    $region22: #{tpu_custom_call.1} parent=1 // pred_check
      _
    $region23: #{tpu_custom_call.1} parent=1 // pred_check_branch
      %72 = sbr.rel (0) target = $region25
    $region24: #{tpu_custom_call.1} parent=1 // pred_region
      %74 = dma.done [#allocation4], 512
    $region25: #{tpu_custom_call.1} parent=1 // pred_fallthru
      _
    %75 = vsyncpa [#allocation3], 1
    %76 = vsyncpa [#allocation6], 1
    %77 = vsyncpa [#allocation4], 1

</llo_original>
